<compile_context>
chip_gen: v6e
topology: v6e:2x2x1
jax: 0.10.0
libtpu: 0.0.40
codegen_flags: <defaults>
</compile_context>

<pallas_src>
import jax
import jax.numpy as jnp
import numpy as np
from jax.experimental import pallas as pl
from jax.experimental.pallas import tpu as pltpu


# ----------------------------------------------------------------------------- kernel
def _adaptive_fusion2_kernel(
    x_ref, ctx_ref, t_ref,                       # activations (bf16)
    wl_ref, bl_ref, wb_ref, bb_ref, wg_ref, bg_ref,  # weights (bf16) / biases (f32)
    out_ref,
):
    # MXU matmuls: bf16 operands, f32 accumulation.
    lin = jnp.dot(x_ref[...], wl_ref[...], preferred_element_type=jnp.float32)
    lin = lin + bl_ref[...]                                        # _layer(x)

    hyper_bias = jnp.dot(ctx_ref[...], wb_ref[...],
                         preferred_element_type=jnp.float32)
    hyper_bias = hyper_bias + bb_ref[...]                          # _hyper_bias(ctx)

    gate_logits = jnp.dot(t_ref[...], wg_ref[...],
                          preferred_element_type=jnp.float32)
    gate_logits = gate_logits + bg_ref[...]                        # _hyper_gate1(timeemb)

    gate1 = jax.nn.sigmoid(gate_logits)                            # f32 (EUP exp)
    out_ref[...] = (lin * gate1 + hyper_bias * (1.0 - gate1)).astype(out_ref.dtype)


# --------------------------------------------------------------------------- wrapper
def adaptive_fusion2(ctx, x, timeemb, params):
    """ctx: (B, N, dim_ctx) or (B, 1, dim_ctx); x: (B, N, dim_in);
    timeemb: (B, N, dim_time) or (B, 1, dim_time)."""
    B, N, dim_in = x.shape
    dim_ctx = ctx.shape[-1]
    dim_time = timeemb.shape[-1]
    dim_out = params["wl_t"].shape[-1]

    ctx = jnp.broadcast_to(ctx, (B, N, dim_ctx))
    timeemb = jnp.broadcast_to(timeemb, (B, N, dim_time))

    LANE, SUB = 128, 8
    f32, bf16 = jnp.float32, jnp.bfloat16

    # Row tiling over the flattened (B*N) dimension.
    R = B * N
    block_rows = max(SUB, min(512, pl.next_power_of_2(R)))
    num_blocks = pl.cdiv(R, block_rows)
    R_pad = num_blocks * block_rows

    dim_out_pad = pl.cdiv(dim_out, LANE) * LANE        # lane-dense output stores
    dim_time_pad = pl.cdiv(dim_time, SUB) * SUB        # align tiny gate contraction dim

    def pad2(a, rows, cols):
        r, c = a.shape
        return jnp.pad(a, ((0, rows - r), (0, cols - c)))

    # Activations: flatten batch, cast to bf16 (MXU operands only), pad rows.
    x2 = pad2(x.reshape(R, dim_in).astype(bf16), R_pad, dim_in)
    c2 = pad2(ctx.reshape(R, dim_ctx).astype(bf16), R_pad, dim_ctx)
    t2 = pad2(timeemb.reshape(R, dim_time).astype(bf16), R_pad, dim_time_pad)

    # Weights pre-transposed to (in, out); zero-pad output columns to 128 lanes.
    wl = pad2(params["wl_t"].astype(bf16), dim_in, dim_out_pad)
    bl = pad2(params["bl"].reshape(1, dim_out).astype(f32), 1, dim_out_pad)
    wb = pad2(params["wb_t"].astype(bf16), dim_ctx, dim_out_pad)
    bb = pad2(params["bb"].reshape(1, dim_out).astype(f32), 1, dim_out_pad)
    wg = pad2(params["wg1_t"].astype(bf16), dim_time_pad, dim_out_pad)
    bg = pad2(params["bg1"].reshape(1, dim_out).astype(f32), 1, dim_out_pad)
    weights = [wl, bl, wb, bb, wg, bg]

    grid_spec = pltpu.PrefetchScalarGridSpec(
        num_scalar_prefetch=0,
        grid=(num_blocks,),
        in_specs=[
            pl.BlockSpec((block_rows, dim_in), lambda i: (i, 0)),        # x
            pl.BlockSpec((block_rows, dim_ctx), lambda i: (i, 0)),       # ctx
            pl.BlockSpec((block_rows, dim_time_pad), lambda i: (i, 0)),  # timeemb
        ] + [pl.BlockSpec(w.shape, lambda i: (0, 0)) for w in weights],  # grid-invariant
        out_specs=pl.BlockSpec((block_rows, dim_out_pad), lambda i: (i, 0)),
    )

    out = pl.pallas_call(
        _adaptive_fusion2_kernel,
        out_shape=jax.ShapeDtypeStruct((R_pad, dim_out_pad), f32),
        grid_spec=grid_spec,
        compiler_params=pltpu.CompilerParams(dimension_semantics=("parallel",)),
    )(x2, c2, t2, *weights)

    return out[:R, :dim_out].reshape(B, N, dim_out)


# ------------------------------------------------------------------ pure-JAX reference
def adaptive_fusion2_ref(ctx, x, timeemb, params):
    gate1 = jax.nn.sigmoid(timeemb @ params["wg1_t"] + params["bg1"])
    lin = x @ params["wl_t"] + params["bl"]
    hyper_bias = ctx @ params["wb_t"] + params["bb"]
    return lin * gate1 + hyper_bias * (1.0 - gate1)


# ------------------------------------------------------------------------------ main
if __name__ == "__main__":
    # Small shapes consistent with AdaptiveFusion2(dim_in=32, dim_out=32, dim_ctx=16, dim_time=3)
    B, N = 2, 16
    dim_in, dim_out, dim_ctx, dim_time = 32, 32, 16, 3

    key = jax.random.PRNGKey(0)
    keys = jax.random.split(key, 10)
    sc = 0.05

    def rnd(k, shape):
        return (sc * jax.random.normal(k, shape)).astype(jnp.float32)

    # Parameters stored pre-transposed: y @ W_t == y @ W.T (PyTorch Linear weight is (out, in)).
    # _hyper_gate2 of the PyTorch module is never used in forward (gate2 = 1 - gate1), so omitted.
    params = {
        "wl_t":  rnd(keys[0], (dim_out, dim_in)).T,
        "bl":    rnd(keys[1], (dim_out,)),
        "wb_t":  rnd(keys[2], (dim_out, dim_ctx)).T,
        "bb":    rnd(keys[3], (dim_out,)),
        "wg1_t": rnd(keys[4], (dim_out, dim_time)).T,
        "bg1":   rnd(keys[5], (dim_out,)),
    }

    x = jax.random.normal(keys[6], (B, N, dim_in), dtype=jnp.float32)
    ctx = jax.random.normal(keys[7], (B, N, dim_ctx), dtype=jnp.float32)
    timeemb = jax.random.normal(keys[8], (B, N, dim_time), dtype=jnp.float32)

    out = adaptive_fusion2(ctx, x, timeemb, params)
    out = jax.block_until_ready(out)

    ref = jax.block_until_ready(adaptive_fusion2_ref(ctx, x, timeemb, params))
    # bf16 MXU operands (f32 accumulation) -> relax tolerance vs f32 reference.
    np.testing.assert_allclose(np.asarray(out), np.asarray(ref), atol=1e-2, rtol=1e-2)

    print("KERNEL_OK")
</pallas_src>

<mosaic_0001>
module attributes {stable_mosaic.version = 11 : i64} {
  func.func @_adaptive_fusion2_kernel(%arg0: i32, %arg1: memref<32x32xbf16, #tpu.memory_space<vmem>>, %arg2: memref<32x16xbf16, #tpu.memory_space<vmem>>, %arg3: memref<32x8xbf16, #tpu.memory_space<vmem>>, %arg4: memref<32x128xbf16, #tpu.memory_space<vmem>>, %arg5: memref<1x128xf32, #tpu.memory_space<vmem>>, %arg6: memref<16x128xbf16, #tpu.memory_space<vmem>>, %arg7: memref<1x128xf32, #tpu.memory_space<vmem>>, %arg8: memref<8x128xbf16, #tpu.memory_space<vmem>>, %arg9: memref<1x128xf32, #tpu.memory_space<vmem>>, %arg10: memref<32x128xf32, #tpu.memory_space<vmem>>) attributes {dimension_semantics = [#tpu.dimension_semantics<parallel>], iteration_bounds = array<i64: 1>, scalar_prefetch = 0 : i64, scratch_operands = 0 : i64, tpu.core_type = #tpu.core_type<tc>, window_params = [{transform_indices = @transform_0, window_bounds = array<i64: 32, 32>}, {transform_indices = @transform_1, window_bounds = array<i64: 32, 16>}, {transform_indices = @transform_2, window_bounds = array<i64: 32, 8>}, {pipeline_mode = #tpu.pipeline_mode<synchronous>, transform_indices = @transform_3, window_bounds = array<i64: 32, 128>}, {pipeline_mode = #tpu.pipeline_mode<synchronous>, transform_indices = @transform_4, window_bounds = array<i64: 1, 128>}, {pipeline_mode = #tpu.pipeline_mode<synchronous>, transform_indices = @transform_5, window_bounds = array<i64: 16, 128>}, {pipeline_mode = #tpu.pipeline_mode<synchronous>, transform_indices = @transform_6, window_bounds = array<i64: 1, 128>}, {pipeline_mode = #tpu.pipeline_mode<synchronous>, transform_indices = @transform_7, window_bounds = array<i64: 8, 128>}, {pipeline_mode = #tpu.pipeline_mode<synchronous>, transform_indices = @transform_8, window_bounds = array<i64: 1, 128>}, {transform_indices = @transform_9, window_bounds = array<i64: 32, 128>}]} {
    %c0 = arith.constant 0 : index
    %c0_0 = arith.constant 0 : index
    %0 = vector.load %arg1[%c0, %c0_0] : memref<32x32xbf16, #tpu.memory_space<vmem>>, vector<32x32xbf16>
    %c0_1 = arith.constant 0 : index
    %c0_2 = arith.constant 0 : index
    %1 = vector.load %arg4[%c0_1, %c0_2] : memref<32x128xbf16, #tpu.memory_space<vmem>>, vector<32x128xbf16>
    %cst = arith.constant dense<0.000000e+00> : vector<32x128xf32>
    %2 = tpu.matmul %0, %1, %cst {dimension_numbers = #tpu.dot_dimension_numbers<[1], [0], [0], [1], [0, 0, 1, 1], [], []>} : vector<32x32xbf16>, vector<32x128xbf16>, vector<32x128xf32> -> vector<32x128xf32>
    %c0_3 = arith.constant 0 : index
    %c0_4 = arith.constant 0 : index
    %3 = vector.load %arg5[%c0_3, %c0_4] : memref<1x128xf32, #tpu.memory_space<vmem>>, vector<1x128xf32>
    %4 = vector.broadcast %3 : vector<1x128xf32> to vector<32x128xf32>
    %5 = arith.addf %2, %4 : vector<32x128xf32>
    %c0_5 = arith.constant 0 : index
    %c0_6 = arith.constant 0 : index
    %6 = vector.load %arg2[%c0_5, %c0_6] : memref<32x16xbf16, #tpu.memory_space<vmem>>, vector<32x16xbf16>
    %c0_7 = arith.constant 0 : index
    %c0_8 = arith.constant 0 : index
    %7 = vector.load %arg6[%c0_7, %c0_8] : memref<16x128xbf16, #tpu.memory_space<vmem>>, vector<16x128xbf16>
    %cst_9 = arith.constant dense<0.000000e+00> : vector<32x128xf32>
    %8 = tpu.matmul %6, %7, %cst_9 {dimension_numbers = #tpu.dot_dimension_numbers<[1], [0], [0], [1], [0, 0, 1, 1], [], []>} : vector<32x16xbf16>, vector<16x128xbf16>, vector<32x128xf32> -> vector<32x128xf32>
    %c0_10 = arith.constant 0 : index
    %c0_11 = arith.constant 0 : index
    %9 = vector.load %arg7[%c0_10, %c0_11] : memref<1x128xf32, #tpu.memory_space<vmem>>, vector<1x128xf32>
    %10 = vector.broadcast %9 : vector<1x128xf32> to vector<32x128xf32>
    %11 = arith.addf %8, %10 : vector<32x128xf32>
    %c0_12 = arith.constant 0 : index
    %c0_13 = arith.constant 0 : index
    %12 = vector.load %arg3[%c0_12, %c0_13] : memref<32x8xbf16, #tpu.memory_space<vmem>>, vector<32x8xbf16>
    %c0_14 = arith.constant 0 : index
    %c0_15 = arith.constant 0 : index
    %13 = vector.load %arg8[%c0_14, %c0_15] : memref<8x128xbf16, #tpu.memory_space<vmem>>, vector<8x128xbf16>
    %cst_16 = arith.constant dense<0.000000e+00> : vector<32x128xf32>
    %14 = tpu.matmul %12, %13, %cst_16 {dimension_numbers = #tpu.dot_dimension_numbers<[1], [0], [0], [1], [0, 0, 1, 1], [], []>} : vector<32x8xbf16>, vector<8x128xbf16>, vector<32x128xf32> -> vector<32x128xf32>
    %c0_17 = arith.constant 0 : index
    %c0_18 = arith.constant 0 : index
    %15 = vector.load %arg9[%c0_17, %c0_18] : memref<1x128xf32, #tpu.memory_space<vmem>>, vector<1x128xf32>
    %16 = vector.broadcast %15 : vector<1x128xf32> to vector<32x128xf32>
    %17 = arith.addf %14, %16 : vector<32x128xf32>
    %18 = arith.negf %17 : vector<32x128xf32>
    %19 = math.exp %18 : vector<32x128xf32>
    %cst_19 = arith.constant 1.000000e+00 : f32
    %20 = vector.broadcast %cst_19 : f32 to vector<32x128xf32>
    %21 = arith.addf %20, %19 : vector<32x128xf32>
    %22 = arith.divf %20, %21 : vector<32x128xf32>
    %23 = arith.mulf %5, %22 : vector<32x128xf32>
    %cst_20 = arith.constant 1.000000e+00 : f32
    %24 = vector.broadcast %cst_20 : f32 to vector<32x128xf32>
    %25 = arith.subf %24, %22 : vector<32x128xf32>
    %26 = arith.mulf %11, %25 : vector<32x128xf32>
    %27 = arith.addf %23, %26 : vector<32x128xf32>
    %c0_21 = arith.constant 0 : index
    %c0_22 = arith.constant 0 : index
    %28 = vector.load %arg10[%c0_21, %c0_22] : memref<32x128xf32, #tpu.memory_space<vmem>>, vector<32x128xf32>
    tpu.vector_store %arg10[%c0_21, %c0_22], %27 {strides = array<i32>} : memref<32x128xf32, #tpu.memory_space<vmem>>, vector<32x128xf32>,
    return
  }
  func.func @transform_0(%arg0: i32) -> (i32, i32) {
    %c0_i32 = arith.constant 0 : i32
    %c0_i32_0 = arith.constant 0 : i32
    return %arg0, %c0_i32 : i32, i32
  }
  func.func @transform_1(%arg0: i32) -> (i32, i32) {
    %c0_i32 = arith.constant 0 : i32
    %c0_i32_0 = arith.constant 0 : i32
    return %arg0, %c0_i32 : i32, i32
  }
  func.func @transform_2(%arg0: i32) -> (i32, i32) {
    %c0_i32 = arith.constant 0 : i32
    %c0_i32_0 = arith.constant 0 : i32
    return %arg0, %c0_i32 : i32, i32
  }
  func.func @transform_3(%arg0: i32) -> (i32, i32) {
    %c0_i32 = arith.constant 0 : i32
    %c0_i32_0 = arith.constant 0 : i32
    %c0_i32_1 = arith.constant 0 : i32
    return %c0_i32, %c0_i32_0 : i32, i32
  }
  func.func @transform_4(%arg0: i32) -> (i32, i32) {
    %c0_i32 = arith.constant 0 : i32
    %c0_i32_0 = arith.constant 0 : i32
    %c0_i32_1 = arith.constant 0 : i32
    return %c0_i32, %c0_i32_0 : i32, i32
  }
  func.func @transform_5(%arg0: i32) -> (i32, i32) {
    %c0_i32 = arith.constant 0 : i32
    %c0_i32_0 = arith.constant 0 : i32
    %c0_i32_1 = arith.constant 0 : i32
    return %c0_i32, %c0_i32_0 : i32, i32
  }
  func.func @transform_6(%arg0: i32) -> (i32, i32) {
    %c0_i32 = arith.constant 0 : i32
    %c0_i32_0 = arith.constant 0 : i32
    %c0_i32_1 = arith.constant 0 : i32
    return %c0_i32, %c0_i32_0 : i32, i32
  }
  func.func @transform_7(%arg0: i32) -> (i32, i32) {
    %c0_i32 = arith.constant 0 : i32
    %c0_i32_0 = arith.constant 0 : i32
    %c0_i32_1 = arith.constant 0 : i32
    return %c0_i32, %c0_i32_0 : i32, i32
  }
  func.func @transform_8(%arg0: i32) -> (i32, i32) {
    %c0_i32 = arith.constant 0 : i32
    %c0_i32_0 = arith.constant 0 : i32
    %c0_i32_1 = arith.constant 0 : i32
    return %c0_i32, %c0_i32_0 : i32, i32
  }
  func.func @transform_9(%arg0: i32) -> (i32, i32) {
    %c0_i32 = arith.constant 0 : i32
    %c0_i32_0 = arith.constant 0 : i32
    return %arg0, %c0_i32 : i32, i32
  }
}

</mosaic_0001>

<llo_original>
// kernel: tpu_custom_call.1
$region0: #{tpu_custom_call.1}
  #allocation0 [shape = 'u32[]', space=smem, size = 0x4, offset = 0x4, fixed_abs, tag = 'smem constant byte address 0x4 - core index']
  #allocation1 [shape = 'u32[144,128]{1,0:T(1,128)}', space=vmem, size = 0x12000, scoped, tag = 'internal scratch']
  %s0 = inlined_call_operand.vmem [shape: bf16[32,32], index: 0, kind: input, shape index: {}]
  %s1 = inlined_call_operand.vmem [shape: bf16[32,16], index: 1, kind: input, shape index: {}]
  %s2 = inlined_call_operand.vmem [shape: bf16[32,8], index: 2, kind: input, shape index: {}]
  %s3 = inlined_call_operand.vmem [shape: bf16[32,128], index: 3, kind: input, shape index: {}]
  %s4 = inlined_call_operand.vmem [shape: f32[1,128], index: 4, kind: input, shape index: {}]
  %s5 = inlined_call_operand.vmem [shape: bf16[16,128], index: 5, kind: input, shape index: {}]
  %s6 = inlined_call_operand.vmem [shape: f32[1,128], index: 6, kind: input, shape index: {}]
  %s7 = inlined_call_operand.vmem [shape: bf16[8,128], index: 7, kind: input, shape index: {}]
  %s8 = inlined_call_operand.vmem [shape: f32[1,128], index: 8, kind: input, shape index: {}]
  %s9 = inlined_call_operand.hbm [shape: f32[32,128], index: 9, kind: output, shape index: {}]
  %s10 = sld [smem:[#allocation0]]
  $region46: #{tpu_custom_call.1} parent=0
    _
  %s12 = ssub.s32 1, %s10
  %s13 = scalar_select 0, %s12, %s10
  $region1: #{tpu_custom_call.1} parent=0
    #allocation2 [shape = 'u8[16384]{0}', space=vmem, size = 0x4000, scoped, tag = 'output window, operand 0, single buffered']
    #allocation3 [shape = 's32[1]{0}', space=sflag, size = 0x4, scoped, tag = 'scoped memory for tpu_custom_call.1']
    %14 = vsyncpa [#allocation3], 0
    // Predicated region
    $region2: #{tpu_custom_call.1} parent=1 // pred_check
      _
    $region3: #{tpu_custom_call.1} parent=1 // pred_check_branch
      %16 = sbr.rel (0) target = $region5
    $region4: #{tpu_custom_call.1} parent=1 // pred_region
      _
    $region5: #{tpu_custom_call.1} parent=1 // pred_fallthru
      _
    // Predicated region
    $region6: #{tpu_custom_call.1} parent=1 // pred_check
      _
    $region7: #{tpu_custom_call.1} parent=1 // pred_check_branch
      %18 = sbr.rel (0) target = $region9
    $region8: #{tpu_custom_call.1} parent=1 // pred_region
      _
    $region9: #{tpu_custom_call.1} parent=1 // pred_fallthru
      _
    // Predicated region
    $region10: #{tpu_custom_call.1} parent=1 // pred_check
      _
    $region11: #{tpu_custom_call.1} parent=1 // pred_check_branch
      %20 = sbr.rel (0) target = $region13
    $region12: #{tpu_custom_call.1} parent=1 // pred_region
      _
    $region13: #{tpu_custom_call.1} parent=1 // pred_fallthru
      _
    // Predicated region
    $region14: #{tpu_custom_call.1} parent=1 // pred_check
      _
    $region15: #{tpu_custom_call.1} parent=1 // pred_check_branch
      %22 = sbr.rel (0) target = $region17
    $region16: #{tpu_custom_call.1} parent=1 // pred_region
      _
    $region17: #{tpu_custom_call.1} parent=1 // pred_fallthru
      _
    // Predicated region
    $region18: #{tpu_custom_call.1} parent=1 // pred_check
      _
    $region19: #{tpu_custom_call.1} parent=1 // pred_check_branch
      %24 = sbr.rel (0) target = $region21
    $region20: #{tpu_custom_call.1} parent=1 // pred_region
      _
    $region21: #{tpu_custom_call.1} parent=1 // pred_fallthru
      _
    // Predicated region
    $region22: #{tpu_custom_call.1} parent=1 // pred_check
      _
    $region23: #{tpu_custom_call.1} parent=1 // pred_check_branch
      %26 = sbr.rel (0) target = $region25
    $region24: #{tpu_custom_call.1} parent=1 // pred_region
      _
    $region25: #{tpu_custom_call.1} parent=1 // pred_fallthru
      _
    // Predicated region
    $region26: #{tpu_custom_call.1} parent=1 // pred_check
      _
    $region27: #{tpu_custom_call.1} parent=1 // pred_check_branch
      %28 = sbr.rel (0) target = $region29
    $region28: #{tpu_custom_call.1} parent=1 // pred_region
      _
    $region29: #{tpu_custom_call.1} parent=1 // pred_fallthru
      _
    // Predicated region
    $region30: #{tpu_custom_call.1} parent=1 // pred_check
      _
    $region31: #{tpu_custom_call.1} parent=1 // pred_check_branch
      %30 = sbr.rel (0) target = $region33
    $region32: #{tpu_custom_call.1} parent=1 // pred_region
      _
    $region33: #{tpu_custom_call.1} parent=1 // pred_fallthru
      _
    // Predicated region
    $region34: #{tpu_custom_call.1} parent=1 // pred_check
      _
    $region35: #{tpu_custom_call.1} parent=1 // pred_check_branch
      %32 = sbr.rel (0) target = $region37
    $region36: #{tpu_custom_call.1} parent=1 // pred_region
      _
    $region37: #{tpu_custom_call.1} parent=1 // pred_fallthru
      _
    %v34 = vld [vmem:[%s0] sm:$0xf]
    %v35 = vld [vmem:[%s0 + $0x4] sm:$0xf]
    %v36 = vld [vmem:[%s0 + $0x8] sm:$0xf]
    %v37 = vld [vmem:[%s0 + $0xc] sm:$0xf]
    %v38 = vld [vmem:[%s3] sm:$0xf]
    %v39 = vld [vmem:[%s3 + $0x4] sm:$0xf]
    %v40 = vld [vmem:[%s3 + $0x8] sm:$0xf]
    %v41 = vld [vmem:[%s3 + $0xc] sm:$0xf]
    %v42 = vld [vmem:[%s4] sm:$0x1]
    %v44 = vlaneseq
    %v45 = vshrl.u32 %v44, 7
    %v46 = vsub.s32 0, %v45
    %v47 = vrot.slane %v42, %v46
    %v53 = vunpack.c.l.b16 %v34
    %v54 = vunpack.c.l.b16 %v35
    %v55 = vunpack.c.l.b16 %v36
    %v56 = vunpack.c.l.b16 %v37
    %v57 = vpack.c.b16 %v54, %v53
    %v58 = vpack.c.b16 %v56, %v55
    %v63 = vunpack.c.l.b16 %v38
    %v64 = vunpack.c.l.b16 %v39
    %v65 = vunpack.c.l.b16 %v40
    %v66 = vunpack.c.l.b16 %v41
    %v67 = vpack.c.b16 %v64, %v63
    %v68 = vpack.c.b16 %v66, %v65
    %vm71 = vcmask 261120
    %v73 = vsel %vm71, %v57, 0
    %v76 = vsel %vm71, %v58, 0
    %78 = vmatprep.subr.bf16.mxu0 0
    %79 = vmatpush1.bf16.msra.mxu0 0
    %80 = vmatprep.subr.bf16.mxu0 0
    %81 = vmatpush1.bf16.msra.mxu0 0
    %82 = vmatprep.subr.bf16.mxu0 0
    %83 = vmatpush1.bf16.msra.mxu0 0
    %84 = vmatprep.subr.bf16.mxu0 0
    %85 = vmatpush1.bf16.msra.mxu0 0
    %86 = vmatprep.subr.bf16.mxu0 0
    %87 = vmatpush1.bf16.msra.mxu0 0
    %88 = vmatprep.subr.bf16.mxu0 0
    %89 = vmatpush1.bf16.msra.mxu0 0
    %90 = vmatprep.subr.bf16.mxu0 0
    %91 = vmatpush1.bf16.msra.mxu0 %v68
    %92 = vmatprep.subr.bf16.mxu0 0
    %93 = vmatpush1.bf16.msra.mxu0 %v67
    %94 = vmatprep.subr.bf16.mxu0 0
    %95 = vmatpush2.bf16.msra.mxu0 0
    %96 = vmatprep.subr.bf16.mxu0 0
    %97 = vmatpush2.bf16.msra.mxu0 0
    %98 = vmatprep.subr.bf16.mxu0 0
    %99 = vmatpush2.bf16.msra.mxu0 0
    %100 = vmatprep.subr.bf16.mxu0 0
    %101 = vmatpush2.bf16.msra.mxu0 0
    %102 = vmatprep.subr.bf16.mxu0 0
    %103 = vmatpush2.bf16.msra.mxu0 0
    %104 = vmatprep.subr.bf16.mxu0 0
    %105 = vmatpush2.bf16.msra.mxu0 0
    %106 = vmatprep.subr.bf16.mxu0 0
    %107 = vmatpush2.bf16.msra.mxu0 0
    %108 = vmatprep.subr.bf16.mxu0 0
    %109 = vmatpush2.bf16.msra.mxu0 0
    %110 = vmatprep.mubr.bf16.mxu0 0
    %111 = vmatmul.mubr.bf16.gmra.mxu0 %v73
    %v112 = vpop.f32.mrf.mxu0
    %v113 = vadd.f32 %v47, %v112
    %v114 = vpop.f32.mrf.mxu0
    %v115 = vpop.f32.mrf.mxu0
    %v116 = vadd.f32 %v47, %v115
    %v117 = vpop.f32.mrf.mxu0
    %118 = vmatprep.mubr.bf16.mxu0 0
    %119 = vmatmul.mubr.bf16.gmra.mxu0 %v76
    %v120 = vpop.f32.mrf.mxu0
    %v121 = vadd.f32 %v47, %v120
    %v122 = vpop.f32.mrf.mxu0
    %v123 = vpop.f32.mrf.mxu0
    %v124 = vadd.f32 %v47, %v123
    %v125 = vpop.f32.mrf.mxu0
    %126 = vdwg.mxu0
    %v127 = vld [vmem:[%s1] sm:$0xf]
    %v128 = vld [vmem:[%s1 + $0x4] sm:$0xf]
    %v129 = vld [vmem:[%s1 + $0x8] sm:$0xf]
    %v130 = vld [vmem:[%s1 + $0xc] sm:$0xf]
    %v131 = vld [vmem:[%s5] sm:$0xf]
    %v132 = vld [vmem:[%s5 + $0x4] sm:$0xf]
    %v133 = vld [vmem:[%s6] sm:$0x1]
    %v135 = vlaneseq
    %v136 = vshrl.u32 %v135, 7
    %v137 = vsub.s32 0, %v136
    %v138 = vrot.slane %v133, %v137
    %v144 = vunpack.c.l.b16 %v127
    %v145 = vunpack.c.l.b16 %v128
    %v146 = vunpack.c.l.b16 %v129
    %v147 = vunpack.c.l.b16 %v130
    %v148 = vpack.c.b16 %v145, %v144
    %v149 = vpack.c.b16 %v147, %v146
    %v152 = vunpack.c.l.b16 %v131
    %v153 = vunpack.c.l.b16 %v132
    %v154 = vpack.c.b16 %v153, %v152
    %vm156 = vcmask 130048
    %v158 = vsel %vm156, %v148, 0
    %v161 = vsel %vm156, %v149, 0
    %163 = vmatprep.subr.bf16.mxu0 0
    %164 = vmatpush1.bf16.msra.mxu0 0
    %165 = vmatprep.subr.bf16.mxu0 0
    %166 = vmatpush1.bf16.msra.mxu0 0
    %167 = vmatprep.subr.bf16.mxu0 0
    %168 = vmatpush1.bf16.msra.mxu0 0
    %169 = vmatprep.subr.bf16.mxu0 0
    %170 = vmatpush1.bf16.msra.mxu0 0
    %171 = vmatprep.subr.bf16.mxu0 0
    %172 = vmatpush1.bf16.msra.mxu0 0
    %173 = vmatprep.subr.bf16.mxu0 0
    %174 = vmatpush1.bf16.msra.mxu0 0
    %175 = vmatprep.subr.bf16.mxu0 0
    %176 = vmatpush1.bf16.msra.mxu0 0
    %177 = vmatprep.subr.bf16.mxu0 0
    %178 = vmatpush1.bf16.msra.mxu0 %v154
    %179 = vmatprep.subr.bf16.mxu0 0
    %180 = vmatpush2.bf16.msra.mxu0 0
    %181 = vmatprep.subr.bf16.mxu0 0
    %182 = vmatpush2.bf16.msra.mxu0 0
    %183 = vmatprep.subr.bf16.mxu0 0
    %184 = vmatpush2.bf16.msra.mxu0 0
    %185 = vmatprep.subr.bf16.mxu0 0
    %186 = vmatpush2.bf16.msra.mxu0 0
    %187 = vmatprep.subr.bf16.mxu0 0
    %188 = vmatpush2.bf16.msra.mxu0 0
    %189 = vmatprep.subr.bf16.mxu0 0
    %190 = vmatpush2.bf16.msra.mxu0 0
    %191 = vmatprep.subr.bf16.mxu0 0
    %192 = vmatpush2.bf16.msra.mxu0 0
    %193 = vmatprep.subr.bf16.mxu0 0
    %194 = vmatpush2.bf16.msra.mxu0 0
    %195 = vmatprep.mubr.bf16.mxu0 0
    %196 = vmatmul.mubr.bf16.gmra.mxu0 %v158
    %v197 = vpop.f32.mrf.mxu0
    %v198 = vadd.f32 %v138, %v197
    %v199 = vpop.f32.mrf.mxu0
    %v200 = vpop.f32.mrf.mxu0
    %v201 = vadd.f32 %v138, %v200
    %v202 = vpop.f32.mrf.mxu0
    %203 = vmatprep.mubr.bf16.mxu0 0
    %204 = vmatmul.mubr.bf16.gmra.mxu0 %v161
    %v205 = vpop.f32.mrf.mxu0
    %v206 = vadd.f32 %v138, %v205
    %v207 = vpop.f32.mrf.mxu0
    %v208 = vpop.f32.mrf.mxu0
    %v209 = vadd.f32 %v138, %v208
    %v210 = vpop.f32.mrf.mxu0
    %211 = vdwg.mxu0
    %v212 = vld [vmem:[%s2] sm:$0xf]
    %v213 = vld [vmem:[%s2 + $0x4] sm:$0xf]
    %v214 = vld [vmem:[%s2 + $0x8] sm:$0xf]
    %v215 = vld [vmem:[%s2 + $0xc] sm:$0xf]
    %v216 = vld [vmem:[%s7] sm:$0xf]
    %v217 = vld [vmem:[%s8] sm:$0x1]
    %v219 = vlaneseq
    %v220 = vshrl.u32 %v219, 7
    %v221 = vsub.s32 0, %v220
    %v222 = vrot.slane %v217, %v221
    %v228 = vunpack.c.l.b16 %v212
    %v229 = vunpack.c.l.b16 %v213
    %v230 = vunpack.c.l.b16 %v214
    %v231 = vunpack.c.l.b16 %v215
    %v232 = vpack.c.b16 %v229, %v228
    %v233 = vpack.c.b16 %v231, %v230
    %vm234 = vcmask 64512
    %v236 = vsel %vm234, %v232, 0
    %v239 = vsel %vm234, %v233, 0
    %vm241 = vcmask 1043456
    %v243 = vsel %vm241, %v216, 0
    %245 = vmatprep.subr.bf16.mxu0 0
    %246 = vmatpush1.bf16.msra.mxu0 0
    %247 = vmatprep.subr.bf16.mxu0 0
    %248 = vmatpush1.bf16.msra.mxu0 0
    %249 = vmatprep.subr.bf16.mxu0 0
    %250 = vmatpush1.bf16.msra.mxu0 0
    %251 = vmatprep.subr.bf16.mxu0 0
    %252 = vmatpush1.bf16.msra.mxu0 0
    %253 = vmatprep.subr.bf16.mxu0 0
    %254 = vmatpush1.bf16.msra.mxu0 0
    %255 = vmatprep.subr.bf16.mxu0 0
    %256 = vmatpush1.bf16.msra.mxu0 0
    %257 = vmatprep.subr.bf16.mxu0 0
    %258 = vmatpush1.bf16.msra.mxu0 0
    %259 = vmatprep.subr.bf16.mxu0 0
    %260 = vmatpush1.bf16.msra.mxu0 %v243
    %261 = vmatprep.subr.bf16.mxu0 0
    %262 = vmatpush2.bf16.msra.mxu0 0
    %263 = vmatprep.subr.bf16.mxu0 0
    %264 = vmatpush2.bf16.msra.mxu0 0
    %265 = vmatprep.subr.bf16.mxu0 0
    %266 = vmatpush2.bf16.msra.mxu0 0
    %267 = vmatprep.subr.bf16.mxu0 0
    %268 = vmatpush2.bf16.msra.mxu0 0
    %269 = vmatprep.subr.bf16.mxu0 0
    %270 = vmatpush2.bf16.msra.mxu0 0
    %271 = vmatprep.subr.bf16.mxu0 0
    %272 = vmatpush2.bf16.msra.mxu0 0
    %273 = vmatprep.subr.bf16.mxu0 0
    %274 = vmatpush2.bf16.msra.mxu0 0
    %275 = vmatprep.subr.bf16.mxu0 0
    %276 = vmatpush2.bf16.msra.mxu0 0
    %277 = vmatprep.mubr.bf16.mxu0 0
    %278 = vmatmul.mubr.bf16.gmra.mxu0 %v236
    %v279 = vpop.f32.mrf.mxu0
    %v280 = vadd.f32 %v222, %v279
    %v281 = vpop.f32.mrf.mxu0
    %v282 = vpop.f32.mrf.mxu0
    %v283 = vadd.f32 %v222, %v282
    %v284 = vpop.f32.mrf.mxu0
    %285 = vmatprep.mubr.bf16.mxu0 0
    %286 = vmatmul.mubr.bf16.gmra.mxu0 %v239
    %v287 = vpop.f32.mrf.mxu0
    %v288 = vadd.f32 %v222, %v287
    %v289 = vpop.f32.mrf.mxu0
    %v290 = vpop.f32.mrf.mxu0
    %v291 = vadd.f32 %v222, %v290
    %v292 = vpop.f32.mrf.mxu0
    %293 = vdwg.mxu0
    %v294 = vxor.u32 %v280, 2147483648
    %v295 = vxor.u32 %v283, 2147483648
    %v296 = vxor.u32 %v288, 2147483648
    %v297 = vxor.u32 %v291, 2147483648
    %v298 = vmul.f32 %v294, 1.442695
    %v299 = vpow.pop %v298
    %v300 = vmul.f32 %v295, 1.442695
    %v301 = vpow.pop %v300
    %v302 = vmul.f32 %v296, 1.442695
    %v303 = vpow.pop %v302
    %v304 = vmul.f32 %v297, 1.442695
    %v305 = vpow.pop %v304
    %v306 = vadd.f32 %v299, 1.0
    %v307 = vadd.f32 %v301, 1.0
    %v308 = vadd.f32 %v303, 1.0
    %v309 = vadd.f32 %v305, 1.0
    %v310 = vrcp.pop %v306
    %v311 = vmul.f32 1.0, %v310
    %v312 = vrcp.pop %v307
    %v313 = vmul.f32 1.0, %v312
    %v314 = vrcp.pop %v308
    %v315 = vmul.f32 1.0, %v314
    %v316 = vrcp.pop %v309
    %v317 = vmul.f32 1.0, %v316
    %v318 = vmul.f32 %v113, %v311
    %v319 = vmul.f32 %v116, %v313
    %v320 = vmul.f32 %v121, %v315
    %v321 = vmul.f32 %v124, %v317
    %v322 = vsub.f32 1.0, %v311
    %v323 = vsub.f32 1.0, %v313
    %v324 = vsub.f32 1.0, %v315
    %v325 = vsub.f32 1.0, %v317
    %v326 = vmul.f32 %v198, %v322
    %v327 = vmul.f32 %v201, %v323
    %v328 = vmul.f32 %v206, %v324
    %v329 = vmul.f32 %v209, %v325
    %v330 = vadd.f32 %v318, %v326
    %v331 = vadd.f32 %v319, %v327
    %v332 = vadd.f32 %v320, %v328
    %v333 = vadd.f32 %v321, %v329
    %334 = vst [vmem:[#allocation2] sm:$0xff] %v330
    %335 = vst [vmem:[#allocation2 + $0x8] sm:$0xff] %v331
    %336 = vst [vmem:[#allocation2 + $0x10] sm:$0xff] %v332
    %337 = vst [vmem:[#allocation2 + $0x18] sm:$0xff] %v333
    // Predicated region
    $region38: #{tpu_custom_call.1} parent=1 // pred_check
      _
    $region39: #{tpu_custom_call.1} parent=1 // pred_check_branch
      %339 = sbr.rel (0) target = $region41
    $region40: #{tpu_custom_call.1} parent=1 // pred_region
      %s341 = ssub.s32 512, 512
      %342 = vsyncadd [#allocation3], %s341
      %s343 = sshll.u32 [#allocation2], 4
      %s344 = int_to_ptr.vmem [resolvable:$true] %s343
      %349 = dma.vmem_to_hbm [thread:$0]  %s344, 512, %s9, [#allocation3], 128, 128, 8
    $region41: #{tpu_custom_call.1} parent=1 // pred_fallthru
      _
    // Predicated region
    $region42: #{tpu_custom_call.1} parent=1 // pred_check
      _
    $region43: #{tpu_custom_call.1} parent=1 // pred_check_branch
      %351 = sbr.rel (0) target = $region45
    $region44: #{tpu_custom_call.1} parent=1 // pred_region
      %352 = dma.done [#allocation3], 512
    $region45: #{tpu_custom_call.1} parent=1 // pred_fallthru
      _
    %353 = vsyncpa [#allocation3], 1

</llo_original>
